<compile_context>
chip_gen: v6e
topology: v6e:2x2x1
jax: 0.10.0
libtpu: 0.0.40
codegen_flags: <defaults>
</compile_context>

<pallas_src>
import functools

import jax
import jax.numpy as jnp
from jax.experimental import pallas as pl
from jax.experimental.pallas import tpu as pltpu


def _avg_pool_channel_kernel(x_ref, o_ref, *, poolsize, c_out, thw):
    # x_ref: (1, c_out*poolsize, THW) VMEM tile; o_ref: (1, c_out, THW).
    x = x_ref[0].astype(jnp.float32)            # (C, THW)
    x = x.reshape(c_out, poolsize, thw)         # group consecutive channels
    avg = x.sum(axis=1) * (1.0 / poolsize)      # (c_out, THW)
    o_ref[0] = avg.astype(o_ref.dtype)


def avg_pool_channel(x, poolsize):
    """x: (B, C, T, H, W).  Returns (B, C // poolsize, T, H, W)."""
    B, C, T, H, W = x.shape
    c_out = C // poolsize
    c_used = c_out * poolsize          # AvgPool3d floor mode drops the remainder
    THW = T * H * W
    itemsize = jnp.dtype(x.dtype).itemsize

    # Layout plumbing only: lane-dense trailing axis.
    x3 = x[:, :c_used].reshape(B, c_used, THW)

    # Double-buffered input + output slabs per grid step, plus slack.
    vmem_need = 2 * (c_used + c_out) * THW * itemsize + (1 << 20)
    vmem_limit = int(min(64 * 1024 * 1024, max(vmem_need, 16 * 1024 * 1024)))
    # TODO(synk): if c_used * THW * itemsize ever exceeds ~12 MiB (the
    # production (1024, 20, 7, 7) shape is only ~4 MiB), also tile the THW axis.

    kernel = functools.partial(
        _avg_pool_channel_kernel, poolsize=poolsize, c_out=c_out, thw=THW)

    out3 = pl.pallas_call(
        kernel,
        out_shape=jax.ShapeDtypeStruct((B, c_out, THW), x.dtype),
        grid_spec=pltpu.PrefetchScalarGridSpec(
            num_scalar_prefetch=0,
            grid=(B,),
            in_specs=[pl.BlockSpec((1, c_used, THW), lambda b: (b, 0, 0))],
            out_specs=pl.BlockSpec((1, c_out, THW), lambda b: (b, 0, 0)),
        ),
        compiler_params=pltpu.CompilerParams(
            dimension_semantics=("parallel",),
            vmem_limit_bytes=vmem_limit,
        ),
        cost_estimate=pl.CostEstimate(
            flops=B * c_used * THW,
            transcendentals=0,
            bytes_accessed=B * (c_used + c_out) * THW * itemsize,
        ),
    )(x3)

    return out3.reshape(B, c_out, T, H, W)


def avg_pool_channel_ref(x, poolsize):
    """Pure-JAX reference mirroring the PyTorch forward exactly."""
    B, C, T, H, W = x.shape
    c_out = C // poolsize
    x = x[:, :c_out * poolsize]
    return x.reshape(B, c_out, poolsize, T, H, W).mean(axis=2).astype(x.dtype)


if __name__ == "__main__":
    key = jax.random.PRNGKey(0)
    # Small shape consistent with (BN, C, T, H, W); THW = 8*4*4 = 128 (lane-dense).
    B, C, T, H, W = 2, 16, 8, 4, 4
    poolsize = 4

    x = jax.random.normal(key, (B, C, T, H, W), dtype=jnp.float32)

    out = avg_pool_channel(x, poolsize)
    out = jax.block_until_ready(out)

    ref = avg_pool_channel_ref(x, poolsize)
    assert out.shape == ref.shape == (B, C // poolsize, T, H, W)
    assert out.dtype == ref.dtype
    assert bool(jnp.allclose(out, ref, rtol=1e-6, atol=1e-6))

    print("KERNEL_OK")
</pallas_src>

<mosaic_0001>
module attributes {stable_mosaic.version = 11 : i64} {
  func.func @_avg_pool_channel_kernel(%arg0: i32, %arg1: memref<1x16x128xf32, #tpu.memory_space<vmem>>, %arg2: memref<1x4x128xf32, #tpu.memory_space<vmem>>) attributes {dimension_semantics = [#tpu.dimension_semantics<parallel>], iteration_bounds = array<i64: 2>, scalar_prefetch = 0 : i64, scratch_operands = 0 : i64, tpu.core_type = #tpu.core_type<tc>, window_params = [{transform_indices = @transform_0, window_bounds = array<i64: 1, 16, 128>}, {transform_indices = @transform_1, window_bounds = array<i64: 1, 4, 128>}]} {
    %c0 = arith.constant 0 : index
    %c0_0 = arith.constant 0 : index
    %c0_1 = arith.constant 0 : index
    %0 = vector.load %arg1[%c0, %c0_0, %c0_1] : memref<1x16x128xf32, #tpu.memory_space<vmem>>, vector<1x16x128xf32>
    %1 = vector.shape_cast %0 : vector<1x16x128xf32> to vector<16x128xf32>
    %2 = vector.shape_cast %1 : vector<16x128xf32> to vector<4x4x128xf32>
    %cst = arith.constant dense<0.000000e+00> : vector<4x128xf32>
    %3 = vector.multi_reduction <add>, %2, %cst [1] : vector<4x4x128xf32> to vector<4x128xf32>
    %cst_2 = arith.constant 2.500000e-01 : f32
    %4 = vector.broadcast %cst_2 : f32 to vector<4x128xf32>
    %5 = arith.mulf %3, %4 : vector<4x128xf32>
    %c0_3 = arith.constant 0 : index
    %c0_4 = arith.constant 0 : index
    %c0_5 = arith.constant 0 : index
    %6 = vector.load %arg2[%c0_3, %c0_4, %c0_5] : memref<1x4x128xf32, #tpu.memory_space<vmem>>, vector<1x4x128xf32>
    %7 = vector.shape_cast %6 : vector<1x4x128xf32> to vector<4x128xf32>
    %8 = vector.shape_cast %5 : vector<4x128xf32> to vector<1x4x128xf32>
    tpu.vector_store %arg2[%c0_3, %c0_4, %c0_5], %8 {strides = array<i32>} : memref<1x4x128xf32, #tpu.memory_space<vmem>>, vector<1x4x128xf32>,
    return
  }
  func.func @transform_0(%arg0: i32) -> (i32, i32, i32) {
    %c0_i32 = arith.constant 0 : i32
    %c0_i32_0 = arith.constant 0 : i32
    %c0_i32_1 = arith.constant 0 : i32
    return %arg0, %c0_i32, %c0_i32_0 : i32, i32, i32
  }
  func.func @transform_1(%arg0: i32) -> (i32, i32, i32) {
    %c0_i32 = arith.constant 0 : i32
    %c0_i32_0 = arith.constant 0 : i32
    %c0_i32_1 = arith.constant 0 : i32
    return %arg0, %c0_i32, %c0_i32_0 : i32, i32, i32
  }
}

</mosaic_0001>

<llo_original>
// kernel: tpu_custom_call.1
$region0: #{tpu_custom_call.1}
  #allocation0 [shape = 'u32[]', space=smem, size = 0x4, offset = 0x4, fixed_abs, tag = 'smem constant byte address 0x4 - core index']
  #allocation1 [shape = 'u32[144,128]{1,0:T(1,128)}', space=vmem, size = 0x12000, scoped, tag = 'internal scratch']
  %s0 = inlined_call_operand.hbm [shape: f32[2,16,128], index: 0, kind: input, shape index: {}]
  %s1 = inlined_call_operand.hbm [shape: f32[2,4,128], index: 1, kind: output, shape index: {}]
  %s2 = sld [smem:[#allocation0]]
  $region41: #{tpu_custom_call.1} parent=0
    _
  %s4 = ssub.s32 1, %s2
  %s5 = scalar_select 0, %s4, %s2
  $region1: #{tpu_custom_call.1} parent=0
    #allocation2 [shape = 'u8[16384]{0}', space=vmem, size = 0x4000, scoped, tag = 'input window, operand 0']
    #allocation3 [shape = 's32[2]{0}', space=sflag, size = 0x8, scoped, tag = 'scoped memory for tpu_custom_call.1']
    #allocation4 [shape = 's32[2]{0}', space=sflag, size = 0x8, scoped, tag = 'scoped memory for tpu_custom_call.1']
    #allocation5 [shape = 'u8[4096]{0}', space=vmem, size = 0x1000, scoped, tag = 'output window, operand 0']
    %6 = vsyncpa [#allocation3], 0
    %s7 = scalar_lea.sflag [#allocation3], 1
    %8 = vsyncpa %s7, 0
    %9 = vsyncpa [#allocation4], 0
    %s10 = scalar_lea.sflag [#allocation4], 1
    %11 = vsyncpa %s10, 0
    loop: start=0, step=1, limit=4
    $region2: #{tpu_custom_call.1} parent=1 // loop_pre_header
      _
    $region3: #{tpu_custom_call.1} parent=1 // loop_header
      %s13 = sphi 0, %s17
      %p14 = scmp.ge.s32.totalorder %s13, 4
      %s23 = sphi 0, %s25
      %s26 = sphi 0, %s23
      %s27 = sphi 0, %s26
      %s43 = sphi 0, %s27
      %s49 = sphi 0, %s51
      %s52 = sphi 0, %s49
      %s53 = sphi 0, %s52
      %s69 = sphi 0, %s53
    $region4: #{tpu_custom_call.1} parent=1 // loop_header_branch
      %16 = sbr.rel (%p14) target = $region8
    $region5: #{tpu_custom_call.1} parent=1 // loop_body
      %s18 = ssub.s32 %s13, 1
      %s19 = ssub.s32 %s13, 2
      %s20 = sadd.s32 %s13, 1
      %s21 = ssub.s32 %s13, %s20
      %p22 = scmp.eq.s32.totalorder %s21, 0
      %s24 = sadd.s32 %s23, 1
      %s25 = scalar_select %p22, %s23, %s24
      %p28 = pneg %p22
      %p29 = scmp.eq.s32.totalorder %s13, 1
      %p30 = por %p28, %p29
      %p31 = scmp.ne.s32.totalorder %s23, %s26
      %p32 = scmp.eq.s32.totalorder %s13, 0
      %p33 = por %p31, %p32
      %p34 = scmp.ne.s32.totalorder %s23, %s26
      %p35 = scmp.eq.s32.totalorder %s18, 1
      %p36 = por %p34, %p35
      %p37 = scmp.ne.s32.totalorder %s26, %s27
      %p38 = scmp.eq.s32.totalorder %s18, 0
      %p39 = por %p37, %p38
      %p40 = scmp.ne.s32.totalorder %s26, %s27
      %p41 = scmp.eq.s32.totalorder %s19, 1
      %p42 = por %p40, %p41
      %p44 = scmp.ne.s32.totalorder %s27, %s43
      %p45 = scmp.eq.s32.totalorder %s19, 0
      %p46 = por %p44, %p45
      %s47 = ssub.s32 %s13, %s20
      %p48 = scmp.eq.s32.totalorder %s47, 0
      %s50 = sadd.s32 %s49, 1
      %s51 = scalar_select %p48, %s49, %s50
      %p54 = pneg %p48
      %p55 = scmp.eq.s32.totalorder %s13, 1
      %p56 = por %p54, %p55
      %p57 = scmp.ne.s32.totalorder %s49, %s52
      %p58 = scmp.eq.s32.totalorder %s13, 0
      %p59 = por %p57, %p58
      %p60 = scmp.ne.s32.totalorder %s49, %s52
      %p61 = scmp.eq.s32.totalorder %s18, 1
      %p62 = por %p60, %p61
      %p63 = scmp.ne.s32.totalorder %s52, %s53
      %p64 = scmp.eq.s32.totalorder %s18, 0
      %p65 = por %p63, %p64
      %p66 = scmp.ne.s32.totalorder %s52, %s53
      %p67 = scmp.eq.s32.totalorder %s19, 1
      %p68 = por %p66, %p67
      %p70 = scmp.ne.s32.totalorder %s53, %s69
      %p71 = scmp.eq.s32.totalorder %s19, 0
      %p72 = por %p70, %p71
      %p73 = scmp.le.s32.totalorder 1, %s13
      %p74 = scmp.lt.s32.totalorder %s13, 3
      %p75 = pnand %p73, %p74
      %p76 = pneg %p75
      // Predicated region
      $region9: #{tpu_custom_call.1} parent=5 // pred_check
        _
      $region10: #{tpu_custom_call.1} parent=5 // pred_check_branch
        %78 = sbr.rel (%p75) target = $region12
      $region11: #{tpu_custom_call.1} parent=5 // pred_region
        %s79 = ssub.s32 %s13, 1
      $region12: #{tpu_custom_call.1} parent=5 // pred_fallthru
        _
      %p80 = scmp.lt.s32.totalorder %s13, 2
      // Predicated region
      $region13: #{tpu_custom_call.1} parent=5 // pred_check
        %p81 = pneg %p80
      $region14: #{tpu_custom_call.1} parent=5 // pred_check_branch
        %83 = sbr.rel (%p81) target = $region16
      $region15: #{tpu_custom_call.1} parent=5 // pred_region
        // Predicated region
        $region17: #{tpu_custom_call.1} parent=15 // pred_check
          %p84 = pneg %p33
        $region18: #{tpu_custom_call.1} parent=15 // pred_check_branch
          %86 = sbr.rel (%p84) target = $region20
        $region19: #{tpu_custom_call.1} parent=15 // pred_region
          %s87 = sand.u32 %s23, 1
          %s88 = scalar_lea.sflag [#allocation3], %s87
          %s89 = sand.u32 %s23, 1
          %s90 = smul.addr %s89, 16
          %s91 = scalar_lea.vmem [#allocation2], %s90
          %s93 = ssub.s32 256, 256
          %94 = vsyncadd %s88, %s93
          %s95 = smul.addr %s13, 2
          %s96 = smul.addr %s95, 128
          %s97 = scalar_lea.hbm %s0, %s96
          %s98 = sshll.u32 %s91, 4
          %s99 = int_to_ptr.vmem [resolvable:$true] %s98
          %104 = dma.hbm_to_vmem [thread:$0]  %s97, 256, %s99, %s88, 128, 128, 8
        $region20: #{tpu_custom_call.1} parent=15 // pred_fallthru
          _
      $region16: #{tpu_custom_call.1} parent=5 // pred_fallthru
        _
      %p105 = scmp.le.s32.totalorder 1, %s13
      %p106 = scmp.lt.s32.totalorder %s13, 3
      %p107 = pnand %p105, %p106
      %p108 = pneg %p107
      // Predicated region
      $region21: #{tpu_custom_call.1} parent=5 // pred_check
        _
      $region22: #{tpu_custom_call.1} parent=5 // pred_check_branch
        %110 = sbr.rel (%p107) target = $region24
      $region23: #{tpu_custom_call.1} parent=5 // pred_region
        %s111 = ssub.s32 %s13, 1
        %s112 = sand.u32 %s26, 1
        %s113 = scalar_lea.sflag [#allocation3], %s112
        %s114 = sand.u32 %s26, 1
        %s115 = smul.addr %s114, 16
        %s116 = scalar_lea.vmem [#allocation2], %s115
        // Predicated region
        $region25: #{tpu_custom_call.1} parent=23 // pred_check
          %p117 = pneg %p39
        $region26: #{tpu_custom_call.1} parent=23 // pred_check_branch
          %119 = sbr.rel (%p117) target = $region28
        $region27: #{tpu_custom_call.1} parent=23 // pred_region
          %120 = dma.done %s113, 256
        $region28: #{tpu_custom_call.1} parent=23 // pred_fallthru
          _
        %s121 = sand.u32 %s26, 1
        %s122 = scalar_lea.sflag [#allocation3], %s121
        %s123 = sand.u32 %s26, 1
        %s124 = smul.addr %s123, 16
        %s125 = scalar_lea.vmem [#allocation2], %s124
        %p126 = pneg %p39
        %p127 = pneg %p36
        %p128 = pneg %p65
        %p129 = pneg %p62
        %s130 = sand.u32 %s52, 1
        %s131 = scalar_lea.sflag [#allocation4], %s130
        %s132 = sand.u32 %s52, 1
        %s133 = smul.addr %s132, 4
        %s134 = scalar_lea.vmem [#allocation5], %s133
        %v135 = vld [vmem:[%s116] sm:$0xff]
        %v136 = vld [vmem:[%s116 + $0x8] sm:$0xff]
        %v139 = vcombine.high %v135, %v135
        %v140 = vcombine.high %v136, %v136
        %vm143 = vcmask 1043456
        %v144 = vsel %vm143, %v135, 0.0
        %v145 = vrot.slane %v144, 4
        %v146 = vadd.f32 %v144, %v145
        %v147 = vrot.slane %v146, 2
        %v148 = vadd.f32 %v146, %v147
        %v149 = vrot.slane %v148, 1
        %v150 = vadd.f32 %v148, %v149
        %v151 = vsel %vm143, %v139, 0.0
        %v152 = vrot.slane %v151, 4
        %v153 = vadd.f32 %v151, %v152
        %v154 = vrot.slane %v153, 2
        %v155 = vadd.f32 %v153, %v154
        %v156 = vrot.slane %v155, 1
        %v157 = vadd.f32 %v155, %v156
        %v158 = vsel %vm143, %v136, 0.0
        %v159 = vrot.slane %v158, 4
        %v160 = vadd.f32 %v158, %v159
        %v161 = vrot.slane %v160, 2
        %v162 = vadd.f32 %v160, %v161
        %v163 = vrot.slane %v162, 1
        %v164 = vadd.f32 %v162, %v163
        %v165 = vsel %vm143, %v140, 0.0
        %v166 = vrot.slane %v165, 4
        %v167 = vadd.f32 %v165, %v166
        %v168 = vrot.slane %v167, 2
        %v169 = vadd.f32 %v167, %v168
        %v170 = vrot.slane %v169, 1
        %v171 = vadd.f32 %v169, %v170
        %v172 = vmul.f32 %v150, 0.25
        %v173 = vmul.f32 %v157, 0.25
        %v174 = vmul.f32 %v164, 0.25
        %v175 = vmul.f32 %v171, 0.25
        %vm180 = vcmask 1041409
        %v181 = vsel %vm180, %v173, %v172
        %vm182 = vcmask 1042434
        %v183 = vsel %vm182, %v174, %v181
        %vm184 = vcmask 1043459
        %v185 = vsel %vm184, %v175, %v183
        %187 = vst [vmem:[%s134] sm:$0xf] %v185
        %s188 = sand.u32 %s52, 1
        %s189 = scalar_lea.sflag [#allocation4], %s188
        %s190 = sand.u32 %s52, 1
        %s191 = smul.addr %s190, 4
        %s192 = scalar_lea.vmem [#allocation5], %s191
        // Predicated region
        $region29: #{tpu_custom_call.1} parent=23 // pred_check
          %p193 = pneg %p62
        $region30: #{tpu_custom_call.1} parent=23 // pred_check_branch
          %195 = sbr.rel (%p193) target = $region32
        $region31: #{tpu_custom_call.1} parent=23 // pred_region
          %s197 = ssub.s32 64, 64
          %198 = vsyncadd %s189, %s197
          %s199 = smul.addr %s18, 64
          %s200 = scalar_lea.hbm %s1, %s199
          %s202 = sshll.u32 %s192, 4
          %s203 = int_to_ptr.vmem [resolvable:$true] %s202
          %205 = dma.vmem_to_hbm [thread:$0]  %s203, 64, %s200, %s189
        $region32: #{tpu_custom_call.1} parent=23 // pred_fallthru
          _
      $region24: #{tpu_custom_call.1} parent=5 // pred_fallthru
        _
      %p206 = scmp.le.s32.totalorder 2, %s13
      // Predicated region
      $region33: #{tpu_custom_call.1} parent=5 // pred_check
        %p207 = pneg %p206
      $region34: #{tpu_custom_call.1} parent=5 // pred_check_branch
        %209 = sbr.rel (%p207) target = $region36
      $region35: #{tpu_custom_call.1} parent=5 // pred_region
        %s210 = ssub.s32 %s13, 2
        // Predicated region
        $region37: #{tpu_custom_call.1} parent=35 // pred_check
          %p211 = pneg %p68
        $region38: #{tpu_custom_call.1} parent=35 // pred_check_branch
          %213 = sbr.rel (%p211) target = $region40
        $region39: #{tpu_custom_call.1} parent=35 // pred_region
          %s214 = sand.u32 %s53, 1
          %s215 = scalar_lea.sflag [#allocation4], %s214
          %s216 = sand.u32 %s53, 1
          %s217 = smul.addr %s216, 4
          %s218 = scalar_lea.vmem [#allocation5], %s217
          %219 = dma.done %s215, 64
        $region40: #{tpu_custom_call.1} parent=35 // pred_fallthru
          _
      $region36: #{tpu_custom_call.1} parent=5 // pred_fallthru
        _
    $region6: #{tpu_custom_call.1} parent=1 // loop_footer
      %s17 = sadd.s32 1, %s13
    $region7: #{tpu_custom_call.1} parent=1 // loop_footer_branch
      %12 = sbr.rel target = $region3
    $region8: #{tpu_custom_call.1} parent=1 // loop_exit
      _
    %220 = vsyncpa [#allocation3], 1
    %s221 = scalar_lea.sflag [#allocation3], 1
    %222 = vsyncpa %s221, 1
    %223 = vsyncpa [#allocation4], 1
    %s224 = scalar_lea.sflag [#allocation4], 1
    %225 = vsyncpa %s224, 1

</llo_original>
